<compile_context>
chip_gen: v5e
topology: v5e:2x2
jax: 0.10.0
libtpu: 0.0.40
codegen_flags: <defaults>
</compile_context>

<pallas_src>
import functools
import numpy as np
import jax
import jax.numpy as jnp
from jax.experimental import pallas as pl
from jax.experimental.pallas import tpu as pltpu

# ----------------------------- model hyper-params -----------------------------
NUM_NODE_F = 8        # num_node_features
NUM_EDGE_F = 4        # num_edge_features
N_GNN_LAYERS = 2
GNN_HID = 32
LATENT_DIM = 8
LATENT_DIM_PT = 8
EMB_DIM = 16
OUT_DIM = 20          # fragment vocabulary size
N_RNN_LAYERS = 2
RNN_HID = 32
GE_IN_DIM = 64        # GEEncoder default in_dim

BN_EPS = 1e-5
LEAKY_SLOPE = 0.01    # PyTorch LeakyReLU default

VMEM = pl.BlockSpec(memory_space=pltpu.MemorySpace.VMEM)


def _act(y, act):
    if act == "relu":
        return jnp.maximum(y, 0.0)
    if act == "leaky_relu":
        return jnp.where(y > 0, y, LEAKY_SLOPE * y)
    return y


# ------------------------------- Pallas kernels -------------------------------
def _mlp2_kernel(x_ref, w1_ref, b1_ref, w2_ref, b2_ref, o_ref, *, act1, act2):
    h = jnp.dot(x_ref[...], w1_ref[...], preferred_element_type=jnp.float32) + b1_ref[...]
    h = _act(h, act1)
    y = jnp.dot(h, w2_ref[...], preferred_element_type=jnp.float32) + b2_ref[...]
    o_ref[...] = _act(y, act2)


def pallas_mlp2(x, w1, b1, w2, b2, act1="none", act2="none"):
    """Fused y = act2(act1(x @ w1 + b1) @ w2 + b2).  Eval-mode BatchNorm is already
    folded into (w1, b1).  One pallas_call replaces a Linear->...->Linear chain."""
    # TODO(synk): add a row-tiled grid over M for realistic graph sizes (v7x 64MiB VMEM).
    x = x.astype(jnp.float32)
    m = x.shape[0]
    n = w2.shape[1]
    flops = 2 * m * (w1.shape[0] * w1.shape[1] + w2.shape[0] * w2.shape[1])
    bytes_acc = 4 * (x.size + w1.size + b1.size + w2.size + b2.size + m * n)
    return pl.pallas_call(
        functools.partial(_mlp2_kernel, act1=act1, act2=act2),
        out_shape=jax.ShapeDtypeStruct((m, n), jnp.float32),
        in_specs=[VMEM] * 5,
        out_specs=VMEM,
        cost_estimate=pl.CostEstimate(flops=int(flops), transcendentals=0,
                                      bytes_accessed=int(bytes_acc)),
    )(x, w1, b1.reshape(1, -1), w2, b2.reshape(1, -1))


def _edge_msg_kernel(xs_ref, ea_ref, w_ref, b_ref, o_ref):
    # GINE message: relu(x_j + (edge_attr @ We + be)), edge linear fused in.
    y = xs_ref[...] + jnp.dot(ea_ref[...], w_ref[...],
                              preferred_element_type=jnp.float32) + b_ref[...]
    o_ref[...] = jnp.maximum(y, 0.0)


def pallas_edge_msg(x_src, edge_attr, w, b):
    m, n = x_src.shape
    return pl.pallas_call(
        _edge_msg_kernel,
        out_shape=jax.ShapeDtypeStruct((m, n), jnp.float32),
        in_specs=[VMEM] * 4,
        out_specs=VMEM,
    )(x_src.astype(jnp.float32), edge_attr.astype(jnp.float32), w, b.reshape(1, -1))


def _gru_seq_kernel(emb_ref, mask_ref, cond_ref, c2h_w_ref, c2h_b_ref, *rest,
                    n_layers, emb_dim, hid):
    """Whole GRU decode in one kernel.  Grid axis = time ("arbitrary").
    Weights/cond are VMEM-resident (constant index_map); hidden states are carried
    in VMEM scratch; cond_2_hid (h0) and the final decode Linear are fused in."""
    layer_refs = rest[:4 * n_layers]
    dec_w_ref = rest[4 * n_layers]
    dec_b_ref = rest[4 * n_layers + 1]
    out_ref = rest[4 * n_layers + 2]
    h_refs = rest[4 * n_layers + 3:]

    t = pl.program_id(0)
    cond = cond_ref[...]                                      # (B, cond_dim), resident

    @pl.when(t == 0)
    def _():
        # h_0 = cond_2_hid(cond), repeated for every GRU layer (matches PyTorch).
        h0 = jnp.dot(cond, c2h_w_ref[...],
                     preferred_element_type=jnp.float32) + c2h_b_ref[...]
        for l in range(n_layers):
            h_refs[l][...] = h0

    x = emb_ref[...][0]                                       # (B, emb_dim) at time t
    for l in range(n_layers):
        wi_ref, wh_ref, bi_ref, bh_ref = layer_refs[4 * l: 4 * l + 4]
        h = h_refs[l][...]
        wi = wi_ref[...]
        if l == 0:
            # layer-0 input is concat([frag_emb_t, cond]); split the matmul instead of
            # materializing the concat (cond is time-invariant, stays in VMEM).
            gi = (jnp.dot(x, wi[:emb_dim, :], preferred_element_type=jnp.float32)
                  + jnp.dot(cond, wi[emb_dim:, :], preferred_element_type=jnp.float32)
                  + bi_ref[...])
        else:
            gi = jnp.dot(x, wi, preferred_element_type=jnp.float32) + bi_ref[...]
        gh = jnp.dot(h, wh_ref[...], preferred_element_type=jnp.float32) + bh_ref[...]
        r = jax.nn.sigmoid(gi[:, :hid] + gh[:, :hid])
        z = jax.nn.sigmoid(gi[:, hid:2 * hid] + gh[:, hid:2 * hid])
        n = jnp.tanh(gi[:, 2 * hid:] + r * gh[:, 2 * hid:])
        h_new = (1.0 - z) * n + z * h
        h_refs[l][...] = h_new
        x = h_new                                             # inter-layer dropout: eval

    # pack/pad_packed semantics: GRU output is zero at t >= length[b]; the decode
    # Linear then contributes only its bias there (matches PyTorch exactly).
    masked = x * mask_ref[...][0]
    out = jnp.dot(masked, dec_w_ref[...], preferred_element_type=jnp.float32) + dec_b_ref[...]
    out_ref[...] = out[None, :, :]


def pallas_gru_decoder(emb_tbf, mask_tbf, cond, c2h_w, c2h_b, gru_layers, dec_w, dec_b):
    """emb_tbf: [T, B, emb] teacher-forced inputs, mask_tbf: [T, B, 1] pack mask,
    cond: [B, cond_dim].  Returns decoded logits [T, B, out_dim]."""
    T, B, emb_dim = emb_tbf.shape
    cond_dim = cond.shape[1]
    hid = c2h_w.shape[1]
    out_dim = dec_w.shape[1]
    n_layers = len(gru_layers)

    c2h_b2 = c2h_b.reshape(1, hid)
    dec_b2 = dec_b.reshape(1, out_dim)

    resident = [cond.astype(jnp.float32), c2h_w, c2h_b2]
    for (wi, wh, bi, bh) in gru_layers:
        resident += [wi, wh, bi.reshape(1, -1), bh.reshape(1, -1)]
    resident += [dec_w, dec_b2]

    in_arrays = [emb_tbf.astype(jnp.float32), mask_tbf.astype(jnp.float32)] + resident
    in_specs = ([pl.BlockSpec((1, B, emb_dim), lambda t: (t, 0, 0)),
                 pl.BlockSpec((1, B, 1), lambda t: (t, 0, 0))]
                + [pl.BlockSpec(a.shape, lambda t: (0, 0)) for a in resident])

    flops_step = 2 * B * ((emb_dim + cond_dim) * 3 * hid        # layer-0 input matmuls
                          + n_layers * hid * 3 * hid            # hidden matmuls
                          + (n_layers - 1) * hid * 3 * hid      # layers>0 input matmuls
                          + hid * out_dim)                      # decode
    flops = T * flops_step + 2 * B * cond_dim * hid             # + cond_2_hid once
    trans = T * n_layers * 3 * B * hid
    bytes_acc = 4 * (sum(int(np.prod(a.shape)) for a in in_arrays) + T * B * out_dim)

    grid_spec = pltpu.PrefetchScalarGridSpec(
        num_scalar_prefetch=0,
        grid=(T,),
        in_specs=in_specs,
        out_specs=pl.BlockSpec((1, B, out_dim), lambda t: (t, 0, 0)),
        scratch_shapes=[pltpu.VMEM((B, hid), jnp.float32) for _ in range(n_layers)],
    )
    return pl.pallas_call(
        functools.partial(_gru_seq_kernel, n_layers=n_layers, emb_dim=emb_dim, hid=hid),
        out_shape=jax.ShapeDtypeStruct((T, B, out_dim), jnp.float32),
        grid_spec=grid_spec,
        compiler_params=pltpu.CompilerParams(dimension_semantics=("arbitrary",)),
        cost_estimate=pl.CostEstimate(flops=int(flops), transcendentals=int(trans),
                                      bytes_accessed=int(bytes_acc)),
    )(*in_arrays)


# ----------------------------- parameter creation -----------------------------
class KeyGen:
    def __init__(self, key):
        self.key = key

    def __call__(self):
        self.key, sub = jax.random.split(self.key)
        return sub


def init_linear(kg, in_dim, out_dim):
    bound = 1.0 / np.sqrt(in_dim)
    w = jax.random.uniform(kg(), (in_dim, out_dim), jnp.float32, -bound, bound)
    b = jax.random.uniform(kg(), (out_dim,), jnp.float32, -bound, bound)
    return w, b


def fold_bn(w, b):
    # BatchNorm1d eval with default buffers (mean=0, var=1, gamma=1, beta=0):
    # y = (x @ W + b) / sqrt(1 + eps)   ->   fold the scale into W and b.
    s = 1.0 / np.sqrt(1.0 + BN_EPS)
    return w * s, b * s


def init_ge_encoder(kg, in_dim, out_dim):
    w1, b1 = fold_bn(*init_linear(kg, in_dim, 64))
    w2, b2 = init_linear(kg, 64, out_dim)
    return {'w1': w1, 'b1': b1, 'w2': w2, 'b2': b2}


def init_graph_encoder(kg, nnf, nef, n_layers, hid, out_dim):
    p = {'edge': [], 'conv': []}
    for i in range(n_layers):
        node_dim = nnf if i == 0 else hid
        p['edge'].append(init_linear(kg, nef, node_dim))
        w1, b1 = fold_bn(*init_linear(kg, node_dim, hid))   # Linear + BN folded
        w2, b2 = init_linear(kg, hid, hid)
        p['conv'].append((w1, b1, w2, b2))
    ow1, ob1 = init_linear(kg, hid, out_dim)
    ow2, ob2 = init_linear(kg, out_dim, out_dim)
    p['out'] = (ow1, ob1, ow2, ob2)
    return p


def init_gru_layer(kg, in_dim, hid):
    bound = 1.0 / np.sqrt(hid)

    def u(shape):
        return jax.random.uniform(kg(), shape, jnp.float32, -bound, bound)

    # merged gate weights, PyTorch gate order (reset | update | new)
    return (u((in_dim, 3 * hid)), u((hid, 3 * hid)), u((3 * hid,)), u((3 * hid,)))


def init_fame_params(seed=0):
    kg = KeyGen(jax.random.PRNGKey(seed))
    P = {}
    ge_pt_out = LATENT_DIM_PT * 2   # pretrained graph_encoder output
    enc_out = LATENT_DIM * 2        # joint encoder output (mu||logvar)

    # JointGraphEncoderFT
    jg = {}
    jg['graph_encoder'] = init_graph_encoder(kg, NUM_NODE_F, NUM_EDGE_F,
                                             N_GNN_LAYERS, GNN_HID, ge_pt_out)
    jg['ft_w1'], jg['ft_b1'] = fold_bn(*init_linear(kg, ge_pt_out, 64))
    jg['ft_w2'], jg['ft_b2'] = init_linear(kg, 64, enc_out)
    jg['ge_encoder'] = init_ge_encoder(kg, GE_IN_DIM, enc_out)
    jg['enc_w1'], jg['enc_b1'] = init_linear(kg, enc_out * 2, enc_out * 2)
    jg['enc_w2'], jg['enc_b2'] = init_linear(kg, enc_out * 2, enc_out)
    P['graph_encoder'] = jg

    # FAME.ge_encoder
    P['ge_encoder'] = init_ge_encoder(kg, GE_IN_DIM, LATENT_DIM)

    # GraphDecoderFT
    gd = {}
    gd['ftl_w1'], gd['ftl_b1'] = init_linear(kg, LATENT_DIM * 2, 64)
    gd['ftl_w2'], gd['ftl_b2'] = init_linear(kg, 64, LATENT_DIM_PT)
    inner = {}
    inner['fragment_embed'] = init_graph_encoder(kg, NUM_NODE_F, NUM_EDGE_F,
                                                 N_GNN_LAYERS, GNN_HID, EMB_DIM)
    inner['c2h_w'], inner['c2h_b'] = init_linear(kg, LATENT_DIM_PT, RNN_HID)
    inner['dec_w'], inner['dec_b'] = init_linear(kg, RNN_HID, OUT_DIM)
    inner['gru'] = [init_gru_layer(kg, EMB_DIM + LATENT_DIM_PT if l == 0 else RNN_HID,
                                   RNN_HID)
                    for l in range(N_RNN_LAYERS)]
    gd['graph_decoder'] = inner
    P['graph_decoder'] = gd
    return P


# ------------------------------- forward passes --------------------------------
def ge_encoder_forward(ge, p):
    # Linear -> BN(folded) -> LeakyReLU -> Dropout(eval) -> Linear, single kernel
    return pallas_mlp2(ge, p['w1'], p['b1'], p['w2'], p['b2'], act1="leaky_relu")


def graph_encoder_forward(graph, p, n_graphs):
    """GINEConv stack + mean pool + out_lin (eval mode)."""
    x, edge_index, edge_attr, batch = graph
    x = x.astype(jnp.float32)
    src, dst = edge_index[0], edge_index[1]
    for (ew, eb), (w1, b1, w2, b2) in zip(p['edge'], p['conv']):
        # fused edge linear + GINE message relu(x_j + edge_attr)
        msg = pallas_edge_msg(x[src], edge_attr, ew, eb)
        aggr = jax.ops.segment_sum(msg, dst, num_segments=x.shape[0])
        h = x + aggr                                  # (1 + eps) * x with eps = 0
        # GINE nn (Linear->BN->ReLU->Linear) + trailing Dropout(eval)+ReLU: one kernel
        x = pallas_mlp2(h, w1, b1, w2, b2, act1="relu", act2="relu")
    # scatter(..., reduce='mean') over graph index
    summed = jax.ops.segment_sum(x, batch, num_segments=n_graphs)
    counts = jax.ops.segment_sum(jnp.ones((x.shape[0], 1), jnp.float32),
                                 batch, num_segments=n_graphs)
    pooled = summed / jnp.maximum(counts, 1.0)        # guard against empty graphs
    ow1, ob1, ow2, ob2 = p['out']
    # out_lin: Linear -> ReLU -> Linear, one fused kernel
    return pallas_mlp2(pooled, ow1, ob1, ow2, ob2, act1="relu")


def joint_graph_encoder_forward(graph_drug, ge, p, n_batch):
    g = graph_encoder_forward(graph_drug, p['graph_encoder'], n_batch)
    ft = pallas_mlp2(g, p['ft_w1'], p['ft_b1'], p['ft_w2'], p['ft_b2'],
                     act1="leaky_relu")
    gee = ge_encoder_forward(ge, p['ge_encoder'])
    z = jnp.concatenate([ft, gee], axis=-1)
    return pallas_mlp2(z, p['enc_w1'], p['enc_b1'], p['enc_w2'], p['enc_b2'],
                       act1="leaky_relu")


def graph_decoder_forward(graph_frag, label_shape, length, cond, p):
    n_batch, n_fragment = label_shape
    # TODO(synk): total_frags must be host-concrete (segment_sum num_segments);
    #             pass it as a static arg if this path is ever wrapped in jit.
    total_frags = int(np.asarray(length).sum())
    frag_emb = graph_encoder_forward(graph_frag, p['fragment_embed'], total_frags)

    length = jnp.asarray(length, jnp.int32)                        # [B]
    offsets = jnp.cumsum(length) - length                          # per-seq start
    t_ar = jnp.arange(n_fragment, dtype=jnp.int32)                 # [T]
    # teacher forcing: input at t=0 is SOS (zeros); at t>=1 it is fragment t-1
    gather_idx = jnp.clip(offsets[:, None] + t_ar[None, :] - 1, 0,
                          max(total_frags - 1, 0))
    valid = (t_ar[None, :] >= 1) & (t_ar[None, :] <= length[:, None])
    emb_bt = jnp.where(valid[:, :, None], frag_emb[gather_idx], 0.0)   # [B, T, emb]
    emb_tbf = jnp.transpose(emb_bt, (1, 0, 2))                         # [T, B, emb]
    mask_tbf = (t_ar[:, None] < length[None, :]).astype(jnp.float32)[:, :, None]

    out_tbo = pallas_gru_decoder(emb_tbf, mask_tbf, cond, p['c2h_w'], p['c2h_b'],
                                 p['gru'], p['dec_w'], p['dec_b'])
    return jnp.transpose(out_tbo, (1, 0, 2))                       # [B, T, out_dim]


def graph_decoder_ft_forward(graph_frag, label_shape, length, cond, p):
    c = pallas_mlp2(cond, p['ftl_w1'], p['ftl_b1'], p['ftl_w2'], p['ftl_b2'],
                    act1="leaky_relu")
    return graph_decoder_forward(graph_frag, label_shape, length, c,
                                 p['graph_decoder'])


def fame_forward(params, graph_drug, graph_frag, batch_frag, ge, label, eps_key):
    n_batch = ge.shape[0]
    z = joint_graph_encoder_forward(graph_drug, ge, params['graph_encoder'], n_batch)
    mu, log_var = z[:, :LATENT_DIM], z[:, LATENT_DIM:]
    std = jnp.exp(0.5 * log_var)
    eps = jax.random.normal(eps_key, std.shape, jnp.float32)   # torch.randn_like
    latent = mu + eps * std
    cond = ge_encoder_forward(ge, params['ge_encoder'])
    cond = jnp.concatenate([latent, cond], axis=1)
    output = graph_decoder_ft_forward(graph_frag, label.shape, batch_frag, cond,
                                      params['graph_decoder'])
    return output, mu, log_var, batch_frag


# ------------------------------------ main --------------------------------------
if __name__ == "__main__":
    key = jax.random.PRNGKey(0)
    k1, k2, k3, k4, k5, keps = jax.random.split(key, 6)

    n_batch = 2
    n_fragment = 4

    # graph_drug: 2 molecule graphs, 5 nodes each (bidirectional chain edges)
    nodes_per_drug = 5
    Nd = n_batch * nodes_per_drug
    xd = jax.random.normal(k1, (Nd, NUM_NODE_F), jnp.float32)
    ei = []
    for g in range(n_batch):
        o = g * nodes_per_drug
        for a in range(nodes_per_drug - 1):
            ei.append((o + a, o + a + 1)); ei.append((o + a + 1, o + a))
    edge_index_d = jnp.asarray(np.array(ei, np.int32).T)
    ead = jax.random.normal(k2, (edge_index_d.shape[1], NUM_EDGE_F), jnp.float32)
    batch_d = jnp.asarray(np.repeat(np.arange(n_batch), nodes_per_drug).astype(np.int32))
    graph_drug = (xd, edge_index_d, ead, batch_d)

    # graph_frag: fragment sequences of length [3, 2] -> 5 fragment graphs, 3 nodes each
    length = np.array([3, 2], np.int32)          # = batch_frag in FAME.forward
    total_frags = int(length.sum())
    nodes_per_frag = 3
    Nf = total_frags * nodes_per_frag
    xf = jax.random.normal(k3, (Nf, NUM_NODE_F), jnp.float32)
    eif = []
    for f in range(total_frags):
        o = f * nodes_per_frag
        for a in range(nodes_per_frag - 1):
            eif.append((o + a, o + a + 1)); eif.append((o + a + 1, o + a))
    edge_index_f = jnp.asarray(np.array(eif, np.int32).T)
    eaf = jax.random.normal(k4, (edge_index_f.shape[1], NUM_EDGE_F), jnp.float32)
    batch_f = jnp.asarray(np.repeat(np.arange(total_frags), nodes_per_frag).astype(np.int32))
    graph_frag = (xf, edge_index_f, eaf, batch_f)

    ge = jax.random.normal(k5, (n_batch, GE_IN_DIM), jnp.float32)
    label = jnp.zeros((n_batch, n_fragment), jnp.int32)   # only its shape is used

    params = init_fame_params(seed=0)

    output, mu, log_var, bf = fame_forward(params, graph_drug, graph_frag,
                                           length, ge, label, keps)
    jax.block_until_ready(output)
    jax.block_until_ready(mu)
    jax.block_until_ready(log_var)

    assert output.shape == (n_batch, n_fragment, OUT_DIM)
    assert mu.shape == (n_batch, LATENT_DIM)
    assert log_var.shape == (n_batch, LATENT_DIM)
    assert jnp.all(jnp.isfinite(output))
    assert jnp.all(jnp.isfinite(mu))
    assert jnp.all(jnp.isfinite(log_var))
    print("KERNEL_OK")
</pallas_src>

<mosaic_0001>
module attributes {stable_mosaic.version = 11 : i64} {
  func.func @_edge_msg_kernel(%arg0: memref<16x8xf32, #tpu.memory_space<vmem>>, %arg1: memref<16x4xf32, #tpu.memory_space<vmem>>, %arg2: memref<4x8xf32, #tpu.memory_space<vmem>>, %arg3: memref<1x8xf32, #tpu.memory_space<vmem>>, %arg4: memref<16x8xf32, #tpu.memory_space<vmem>>) attributes {dimension_semantics = [], scalar_prefetch = 0 : i64, scratch_operands = 0 : i64, tpu.core_type = #tpu.core_type<tc>} {
    %c0 = arith.constant 0 : index
    %c0_0 = arith.constant 0 : index
    %0 = vector.load %arg0[%c0, %c0_0] : memref<16x8xf32, #tpu.memory_space<vmem>>, vector<16x8xf32>
    %c0_1 = arith.constant 0 : index
    %c0_2 = arith.constant 0 : index
    %1 = vector.load %arg1[%c0_1, %c0_2] : memref<16x4xf32, #tpu.memory_space<vmem>>, vector<16x4xf32>
    %c0_3 = arith.constant 0 : index
    %c0_4 = arith.constant 0 : index
    %2 = vector.load %arg2[%c0_3, %c0_4] : memref<4x8xf32, #tpu.memory_space<vmem>>, vector<4x8xf32>
    %cst = arith.constant dense<0.000000e+00> : vector<16x8xf32>
    %3 = tpu.matmul %1, %2, %cst {dimension_numbers = #tpu.dot_dimension_numbers<[1], [0], [0], [1], [0, 0, 1, 1], [], []>} : vector<16x4xf32>, vector<4x8xf32>, vector<16x8xf32> -> vector<16x8xf32>
    %4 = arith.addf %0, %3 : vector<16x8xf32>
    %c0_5 = arith.constant 0 : index
    %c0_6 = arith.constant 0 : index
    %5 = vector.load %arg3[%c0_5, %c0_6] : memref<1x8xf32, #tpu.memory_space<vmem>>, vector<1x8xf32>
    %6 = vector.broadcast %5 : vector<1x8xf32> to vector<16x8xf32>
    %7 = arith.addf %4, %6 : vector<16x8xf32>
    %cst_7 = arith.constant 0.000000e+00 : f32
    %8 = vector.broadcast %cst_7 : f32 to vector<16x8xf32>
    %9 = arith.maximumf %7, %8 : vector<16x8xf32>
    %c0_8 = arith.constant 0 : index
    %c0_9 = arith.constant 0 : index
    %10 = vector.load %arg4[%c0_8, %c0_9] : memref<16x8xf32, #tpu.memory_space<vmem>>, vector<16x8xf32>
    tpu.vector_store %arg4[%c0_8, %c0_9], %9 {strides = array<i32>} : memref<16x8xf32, #tpu.memory_space<vmem>>, vector<16x8xf32>,
    return
  }
}

</mosaic_0001>

<llo_original>
// kernel: tpu_custom_call.1
$region0: #{tpu_custom_call.1}
  #allocation0 [shape = 'u32[]', space=smem, size = 0x4, offset = 0x4, fixed_abs, tag = 'smem constant byte address 0x4 - core index']
  #allocation1 [shape = 'u32[72,128]{1,0:T(1,128)}', space=vmem, size = 0x9000, scoped, tag = 'internal scratch']
  %s0 = inlined_call_operand.vmem [shape: f32[16,8], index: 0, kind: input, shape index: {}]
  %s1 = inlined_call_operand.vmem [shape: f32[16,4], index: 1, kind: input, shape index: {}]
  %s2 = inlined_call_operand.vmem [shape: f32[4,8], index: 2, kind: input, shape index: {}]
  %s3 = inlined_call_operand.vmem [shape: f32[1,8], index: 3, kind: input, shape index: {}]
  %s4 = inlined_call_operand.vmem [shape: f32[16,8], index: 4, kind: output, shape index: {}]
  %s5 = sld [smem:[#allocation0]]
  $region26: #{tpu_custom_call.1} parent=0
    _
  %s7 = ssub.s32 1, %s5
  %s8 = scalar_select 0, %s7, %s5
  // Predicated region
  $region2: #{tpu_custom_call.1} parent=0 // pred_check
    _
  $region3: #{tpu_custom_call.1} parent=0 // pred_check_branch
    %10 = sbr.rel (0) target = $region5
  $region4: #{tpu_custom_call.1} parent=0 // pred_region
    _
  $region5: #{tpu_custom_call.1} parent=0 // pred_fallthru
    _
  // Predicated region
  $region6: #{tpu_custom_call.1} parent=0 // pred_check
    _
  $region7: #{tpu_custom_call.1} parent=0 // pred_check_branch
    %12 = sbr.rel (0) target = $region9
  $region8: #{tpu_custom_call.1} parent=0 // pred_region
    _
  $region9: #{tpu_custom_call.1} parent=0 // pred_fallthru
    _
  // Predicated region
  $region10: #{tpu_custom_call.1} parent=0 // pred_check
    _
  $region11: #{tpu_custom_call.1} parent=0 // pred_check_branch
    %14 = sbr.rel (0) target = $region13
  $region12: #{tpu_custom_call.1} parent=0 // pred_region
    _
  $region13: #{tpu_custom_call.1} parent=0 // pred_fallthru
    _
  // Predicated region
  $region14: #{tpu_custom_call.1} parent=0 // pred_check
    _
  $region15: #{tpu_custom_call.1} parent=0 // pred_check_branch
    %16 = sbr.rel (0) target = $region17
  $region16: #{tpu_custom_call.1} parent=0 // pred_region
    _
  $region17: #{tpu_custom_call.1} parent=0 // pred_fallthru
    _
  %v17 = vld [vmem:[%s0] sm:$0xff]
  %v18 = vld [vmem:[%s0 + $0x8] sm:$0xff]
  %v19 = vld [vmem:[%s1] sm:$0xff]
  %v20 = vld [vmem:[%s1 + $0x8] sm:$0xff]
  %v21 = vld [vmem:[%s2] sm:$0xf]
  %vm22 = vcmask 31744
  %v24 = vsel %vm22, %v19, 0
  %v27 = vsel %vm22, %v20, 0
  %vm29 = vcmask 1043456
  %v31 = vsel %vm29, %v21, 0
  %33 = vmatpush.msra.mxu0 0.0
  %34 = vmatpush.msra.mxu0 0.0
  %35 = vmatpush.msra.mxu0 0.0
  %36 = vmatpush.msra.mxu0 0.0
  %37 = vmatpush.msra.mxu0 0.0
  %38 = vmatpush.msra.mxu0 0.0
  %39 = vmatpush.msra.mxu0 0.0
  %40 = vmatpush.msra.mxu0 0.0
  %41 = vmatpush.msra.mxu0 0.0
  %42 = vmatpush.msra.mxu0 0.0
  %43 = vmatpush.msra.mxu0 0.0
  %44 = vmatpush.msra.mxu0 0.0
  %45 = vmatpush.msra.mxu0 0.0
  %46 = vmatpush.msra.mxu0 0.0
  %47 = vmatpush.msra.mxu0 0.0
  %48 = vmatpush.msra.mxu0 %v31
  %49 = vmatmul.f32.gmra.mxu0 %v24
  %v50 = vpop.f32.mrf.mxu0
  %v51 = vadd.f32 0.0, %v50
  %52 = vmatmul.f32.gmra.mxu0 %v27
  %v53 = vpop.f32.mrf.mxu0
  %v54 = vadd.f32 0.0, %v53
  %55 = vdwg.mxu0
  %v56 = vadd.f32 %v17, %v51
  %v57 = vadd.f32 %v18, %v54
  %v58 = vld [vmem:[%s3] sm:$0x1]
  %v60 = vperm.slane %v58, 0
  %v62 = vadd.f32 %v56, %v60
  %v63 = vadd.f32 %v57, %v60
  %v64 = vmax.f32 %v62, 0.0
  %v65 = vmax.f32 %v63, 0.0
  %vm66 = vcmask 64512
  %67 = vst.msk [vmem:[%s4] sm:$0xff] %vm66, %v64
  %68 = vst.msk [vmem:[%s4 + $0x8] sm:$0xff] %vm66, %v65
  // Predicated region
  $region18: #{tpu_custom_call.1} parent=0 // pred_check
    _
  $region19: #{tpu_custom_call.1} parent=0 // pred_check_branch
    %70 = sbr.rel (0) target = $region21
  $region20: #{tpu_custom_call.1} parent=0 // pred_region
    _
  $region21: #{tpu_custom_call.1} parent=0 // pred_fallthru
    _
  // Predicated region
  $region22: #{tpu_custom_call.1} parent=0 // pred_check
    _
  $region23: #{tpu_custom_call.1} parent=0 // pred_check_branch
    %72 = sbr.rel (0) target = $region25
  $region24: #{tpu_custom_call.1} parent=0 // pred_region
    _
  $region25: #{tpu_custom_call.1} parent=0 // pred_fallthru
    _

</llo_original>
